<compile_context>
chip_gen: v6e
topology: v6e:2x2x1
jax: 0.10.0
libtpu: 0.0.40
codegen_flags: <defaults>
</compile_context>

<pallas_src>
import math
import functools

import jax
import jax.numpy as jnp
from jax.experimental import pallas as pl
from jax.experimental.pallas import tpu as pltpu


def _make_pe(max_len: int, d_model: int) -> jnp.ndarray:
    """Deterministic positional-encoding buffer, identical to the PyTorch init."""
    position = jnp.arange(0, max_len, dtype=jnp.float32)[:, None]          # (L, 1)
    div_term = jnp.exp(
        jnp.arange(0, d_model, 2, dtype=jnp.float32) * (-math.log(10000.0) / d_model)
    )                                                                       # (ceil(D/2),)
    pe = jnp.zeros((max_len, d_model), dtype=jnp.float32)
    pe = pe.at[:, 0::2].set(jnp.sin(position * div_term))
    if d_model % 2 != 0:
        pe = pe.at[:, 1::2].set(jnp.cos(position * div_term)[:, :-1])
    else:
        pe = pe.at[:, 1::2].set(jnp.cos(position * div_term))
    return pe[:, None, :]                                                   # (L, 1, D)


def _pe_kernel(seed_ref, x_ref, pe_ref, o_ref, *, training: bool,
               keep_prob: float, compute_dtype):
    """x_ref/o_ref: (rows, rep*Wp) lane-dense; pe_ref: (rows, Wp), Wp | rep*Wp."""
    rows, total_cols = x_ref.shape
    slice_w = pe_ref.shape[1]
    rep = total_cols // slice_w

    if training and keep_prob <= 0.0:
        o_ref[...] = jnp.zeros_like(o_ref)
        return

    drop = training and keep_prob < 1.0
    pe = pe_ref[...].astype(compute_dtype)

    if drop:
        # Counter-based dropout: hash of (global (s,b,d) flat index, seed).
        # row*total_cols + col of this lane-dense view IS the row-major flat
        # index of the original (S,B,D) tensor, so the mask is invariant to
        # tiling and row grouping.
        # TODO(synk): dropout RNG stream intentionally differs from torch's;
        # only the Bernoulli(p) + 1/keep scaling semantics are preserved.
        k1 = 0x9E3779B1
        row_mul = jnp.uint32((total_cols * k1) & 0xFFFFFFFF)
        row0 = jnp.uint32(pl.program_id(0)) * jnp.uint32(rows)
        bias0 = (row0 * row_mul
                 + seed_ref[0].astype(jnp.uint32) * jnp.uint32(0x85EBCA77))
        # Constant multiplies on the small (rows,1)/(1,W) shapes; the only
        # full-size integer work is one broadcast add + the 2-mul finalizer.
        r_part = (jax.lax.broadcasted_iota(jnp.uint32, (rows, 1), 0) * row_mul
                  + bias0)
        c_part = (jax.lax.broadcasted_iota(jnp.uint32, (1, slice_w), 1)
                  * jnp.uint32(k1))
        thresh = jnp.int32(int(round(keep_prob * float(1 << 24))))
        scale = jnp.asarray(1.0 / keep_prob, dtype=compute_dtype)

    # Static unroll over lane-aligned slices; the wrapper keeps rep small.
    for k in range(rep):
        lo, hi = k * slice_w, (k + 1) * slice_w
        y = x_ref[:, lo:hi].astype(compute_dtype) + pe
        if drop:
            h = r_part + (c_part + jnp.uint32((k * slice_w * k1) & 0xFFFFFFFF))
            h = h ^ (h >> jnp.uint32(16))
            h = h * jnp.uint32(0x21F0AAAD)
            h = h ^ (h >> jnp.uint32(15))
            h = h * jnp.uint32(0x735A2D97)
            h = h ^ (h >> jnp.uint32(15))
            # Integer-threshold keep decision on the top 24 bits (no floats).
            keep = (h >> jnp.uint32(8)).astype(jnp.int32) < thresh
            y = jnp.where(keep, y * scale, jnp.zeros_like(y))
        o_ref[:, lo:hi] = y.astype(o_ref.dtype)


def _pick_row_tile(R: int, row_bytes: int, itemsize: int) -> int:
    """~2 MiB x blocks, sublane-aligned for the dtype, >= ~4 grid steps."""
    sub = {4: 8, 2: 16, 1: 32}.get(itemsize, 8)
    target = 2 << 20
    ts = max(1, target // max(row_bytes, 1))
    # Never collapse a large input to a single grid step: keep >= ~4 steps so
    # the BlockSpec pipeline overlaps DMA/compute and v7x can shard the axis.
    ts = min(ts, -(-R // 4))
    if ts >= R:
        return R
    return min(R, max(sub, (ts // sub) * sub))


def positional_encoding(
    x: jnp.ndarray,
    pe: jnp.ndarray,
    *,
    dropout_p: float = 0.1,
    training: bool = False,
    seed: int = 0,
    donate_x: bool = False,
) -> jnp.ndarray:
    """x: (S, B, D); pe: (max_len, 1, D) float32. Returns (S, B, D)."""
    S, B, D = x.shape
    assert pe.shape[1] == 1 and pe.shape[2] == D and pe.shape[0] >= S

    cols = B * D
    compute_dtype = jnp.bfloat16 if x.dtype == jnp.bfloat16 else jnp.float32
    pe_sd = pe[:S, 0, :].astype(compute_dtype)                              # (S, D)

    if cols % 128 == 0:
        # Already lane-dense.  pe stays tiny in HBM: replicate only to a
        # lane-aligned width Wp (a multiple of 128 that divides cols); the
        # remaining replication is whole-vreg slice-adds inside the kernel.
        g, R, C = 1, S, cols
        Wp = D * 128 // math.gcd(D, 128)          # lcm(D, 128), divides cols
        rep = cols // Wp
        while rep > 8 and rep % 2 == 0:           # keep the static unroll modest
            Wp *= 2
            rep //= 2
        pe2 = jnp.tile(pe_sd, (1, Wp // D))       # (S, Wp)
    else:
        # cols is not a multiple of 128: group g sequence rows per kernel row
        # so the output lane width is an unmasked multiple of 128, and pass a
        # batch-replicated pe in the same grouped layout (extra pe read, but
        # no masked vst.msk stores and no cross-lane shuffles in the kernel).
        g = 128 // math.gcd(cols, 128)
        if g > 1 and S % g == 0:
            R, C = S // g, g * cols
        else:
            g, R, C = 1, S, cols                  # rare fallback: masked stores
        Wp = C
        pe2 = jnp.tile(pe_sd, (1, B)).reshape(R, C)

    x2 = x.reshape(R, C)
    itemsize = jnp.dtype(x.dtype).itemsize
    ts = _pick_row_tile(R, C * itemsize, itemsize)
    grid = (pl.cdiv(R, ts),)

    kernel = functools.partial(
        _pe_kernel, training=training, keep_prob=1.0 - float(dropout_p),
        compute_dtype=compute_dtype)
    seed_arr = jnp.array([seed], dtype=jnp.int32)

    out2 = pl.pallas_call(
        kernel,
        out_shape=jax.ShapeDtypeStruct((R, C), x.dtype),
        grid_spec=pltpu.PrefetchScalarGridSpec(
            num_scalar_prefetch=1,
            grid=grid,
            in_specs=[
                pl.BlockSpec((ts, C), lambda i, seed: (i, 0)),
                pl.BlockSpec((ts, Wp), lambda i, seed: (i, 0)),
            ],
            out_specs=pl.BlockSpec((ts, C), lambda i, seed: (i, 0)),
        ),
        compiler_params=pltpu.CompilerParams(
            dimension_semantics=("parallel",),
            # 32 MiB: never below the v6e/v7x scoped default, a raise on v5e,
            # and leaves headroom on v7x's 64 MiB/TC even with double-buffered
            # in/out blocks plus training-mode f32/u32 temporaries.
            vmem_limit_bytes=32 << 20,
        ),
        # x2 is call-operand 1 (after the scalar-prefetch seed).  Aliasing it
        # to the output avoids a second full-size HBM buffer when the caller
        # can donate x (off by default; x is reused below in the test).
        input_output_aliases=({1: 0} if donate_x else {}),
    )(seed_arr, x2, pe2)

    return out2.reshape(S, B, D)


if __name__ == "__main__":
    d_model = 32
    max_len = 5000
    seq_len = 8
    batch = 2

    key = jax.random.PRNGKey(0)
    x = jax.random.normal(key, (seq_len, batch, d_model), dtype=jnp.float32)
    pe = _make_pe(max_len, d_model)
    ref = x + pe[:seq_len]

    # Eval mode: dropout is identity -> exact match against the reference.
    y_eval = jax.block_until_ready(
        positional_encoding(x, pe, dropout_p=0.1, training=False)
    )
    assert jnp.allclose(y_eval, ref, atol=1e-6), "eval-mode mismatch"

    # Train mode: deterministic counter-based dropout; surviving elements must
    # be exact 1/keep_prob-scaled copies of the reference, and the keep rate
    # must be statistically consistent with p=0.1.
    y_train = jax.block_until_ready(
        positional_encoding(x, pe, dropout_p=0.1, training=True, seed=0)
    )
    kept = y_train != 0.0
    assert jnp.allclose(
        jnp.where(kept, y_train, 0.0),
        jnp.where(kept, ref / 0.9, 0.0),
        atol=1e-5,
        rtol=1e-5,
    ), "train-mode dropout scaling mismatch"
    frac_kept = float(jnp.mean(kept.astype(jnp.float32)))
    assert 0.65 <= frac_kept <= 0.995, f"implausible keep rate {frac_kept}"

    print("KERNEL_OK")
</pallas_src>

<mosaic_0001>
module attributes {stable_mosaic.version = 11 : i64} {
  func.func @_pe_kernel(%arg0: i32, %arg1: memref<1xi32, #tpu.memory_space<smem>>, %arg2: memref<4x128xf32, #tpu.memory_space<vmem>>, %arg3: memref<4x128xf32, #tpu.memory_space<vmem>>, %arg4: memref<4x128xf32, #tpu.memory_space<vmem>>) attributes {dimension_semantics = [#tpu.dimension_semantics<parallel>], iteration_bounds = array<i64: 1>, scalar_prefetch = 1 : i64, scratch_operands = 0 : i64, tpu.core_type = #tpu.core_type<tc>, window_params = [{transform_indices = @transform_0, window_bounds = array<i64: 4, 128>}, {transform_indices = @transform_1, window_bounds = array<i64: 4, 128>}, {transform_indices = @transform_2, window_bounds = array<i64: 4, 128>}]} {
    %c0 = arith.constant 0 : index
    %c0_0 = arith.constant 0 : index
    %0 = vector.load %arg3[%c0, %c0_0] : memref<4x128xf32, #tpu.memory_space<vmem>>, vector<4x128xf32>
    %c0_1 = arith.constant 0 : index
    %c0_2 = arith.constant 0 : index
    %1 = vector.load %arg2[%c0_1, %c0_2] : memref<4x128xf32, #tpu.memory_space<vmem>>, vector<4x128xf32>
    %2 = arith.addf %1, %0 : vector<4x128xf32>
    %c0_3 = arith.constant 0 : index
    %c0_4 = arith.constant 0 : index
    %3 = vector.load %arg4[%c0_3, %c0_4] : memref<4x128xf32, #tpu.memory_space<vmem>>, vector<4x128xf32>
    tpu.vector_store %arg4[%c0_3, %c0_4], %2 {strides = array<i32>} : memref<4x128xf32, #tpu.memory_space<vmem>>, vector<4x128xf32>,
    return
  }
  func.func @transform_0(%arg0: i32, %arg1: memref<1xi32, #tpu.memory_space<smem>>) -> (i32, i32) {
    %c0_i32 = arith.constant 0 : i32
    %c0_i32_0 = arith.constant 0 : i32
    return %arg0, %c0_i32 : i32, i32
  }
  func.func @transform_1(%arg0: i32, %arg1: memref<1xi32, #tpu.memory_space<smem>>) -> (i32, i32) {
    %c0_i32 = arith.constant 0 : i32
    %c0_i32_0 = arith.constant 0 : i32
    return %arg0, %c0_i32 : i32, i32
  }
  func.func @transform_2(%arg0: i32, %arg1: memref<1xi32, #tpu.memory_space<smem>>) -> (i32, i32) {
    %c0_i32 = arith.constant 0 : i32
    %c0_i32_0 = arith.constant 0 : i32
    return %arg0, %c0_i32 : i32, i32
  }
}

</mosaic_0001>

<llo_original>
// kernel: tpu_custom_call.1
$region0: #{tpu_custom_call.1}
  #allocation0 [shape = 'u32[]', space=smem, size = 0x4, offset = 0x4, fixed_abs, tag = 'smem constant byte address 0x4 - core index']
  #allocation1 [shape = 'u32[144,128]{1,0:T(1,128)}', space=vmem, size = 0x12000, scoped, tag = 'internal scratch']
  #allocation2 [shape = 's32[1]{0}', space=sflag, size = 0x4, scoped, tag = 'scoped memory for tpu_custom_call.1']
  #allocation3 [shape = 's32[1]{0:T(128)S(6)}', space=smem, size = 0x200, scoped, tag = 'prefetched SMEM operand 0']
  %s0 = inlined_call_operand.<no memory space> [shape: s32[1], index: 0, kind: input, shape index: {}]
  %s1 = inlined_call_operand.hbm [shape: f32[4,128], index: 1, kind: input, shape index: {}]
  %s2 = inlined_call_operand.hbm [shape: f32[4,128], index: 2, kind: input, shape index: {}]
  %s3 = inlined_call_operand.hbm [shape: f32[4,128], index: 3, kind: output, shape index: {}]
  %s4 = sld [smem:[#allocation0]]
  $region26: #{tpu_custom_call.1} parent=0
    _
  %s6 = ssub.s32 1, %s4
  %s7 = scalar_select 0, %s6, %s4
  %8 = sst [smem:[#allocation3]] %s0
  $region1: #{tpu_custom_call.1} parent=0
    #allocation4 [shape = 'u8[2048]{0}', space=vmem, size = 0x800, scoped, tag = 'input window, operand 1, single buffered']
    #allocation5 [shape = 's32[1]{0}', space=sflag, size = 0x4, scoped, tag = 'scoped memory for tpu_custom_call.1']
    #allocation6 [shape = 's32[1]{0}', space=sflag, size = 0x4, scoped, tag = 'scoped memory for tpu_custom_call.1']
    #allocation7 [shape = 'u8[2048]{0}', space=vmem, size = 0x800, scoped, tag = 'input window, operand 2, single buffered']
    #allocation8 [shape = 's32[1]{0}', space=sflag, size = 0x4, scoped, tag = 'scoped memory for tpu_custom_call.1']
    #allocation9 [shape = 'u8[2048]{0}', space=vmem, size = 0x800, scoped, tag = 'output window, operand 0, single buffered']
    %9 = vsyncpa [#allocation5], 0
    %10 = vsyncpa [#allocation8], 0
    %11 = vsyncpa [#allocation6], 0
    // Predicated region
    $region2: #{tpu_custom_call.1} parent=1 // pred_check
      _
    $region3: #{tpu_custom_call.1} parent=1 // pred_check_branch
      %13 = sbr.rel (0) target = $region5
    $region4: #{tpu_custom_call.1} parent=1 // pred_region
      %s15 = ssub.s32 64, 64
      %16 = vsyncadd [#allocation5], %s15
      %s18 = sshll.u32 [#allocation4], 4
      %s19 = int_to_ptr.vmem [resolvable:$true] %s18
      %21 = dma.hbm_to_vmem [thread:$0]  %s1, 64, %s19, [#allocation5]
    $region5: #{tpu_custom_call.1} parent=1 // pred_fallthru
      _
    // Predicated region
    $region6: #{tpu_custom_call.1} parent=1 // pred_check
      _
    $region7: #{tpu_custom_call.1} parent=1 // pred_check_branch
      %23 = sbr.rel (0) target = $region9
    $region8: #{tpu_custom_call.1} parent=1 // pred_region
      %s25 = ssub.s32 64, 64
      %26 = vsyncadd [#allocation8], %s25
      %s28 = sshll.u32 [#allocation7], 4
      %s29 = int_to_ptr.vmem [resolvable:$true] %s28
      %31 = dma.hbm_to_vmem [thread:$0]  %s2, 64, %s29, [#allocation8]
    $region9: #{tpu_custom_call.1} parent=1 // pred_fallthru
      _
    // Predicated region
    $region10: #{tpu_custom_call.1} parent=1 // pred_check
      _
    $region11: #{tpu_custom_call.1} parent=1 // pred_check_branch
      %33 = sbr.rel (0) target = $region13
    $region12: #{tpu_custom_call.1} parent=1 // pred_region
      %34 = dma.done [#allocation5], 64
    $region13: #{tpu_custom_call.1} parent=1 // pred_fallthru
      _
    // Predicated region
    $region14: #{tpu_custom_call.1} parent=1 // pred_check
      _
    $region15: #{tpu_custom_call.1} parent=1 // pred_check_branch
      %36 = sbr.rel (0) target = $region17
    $region16: #{tpu_custom_call.1} parent=1 // pred_region
      %37 = dma.done [#allocation8], 64
    $region17: #{tpu_custom_call.1} parent=1 // pred_fallthru
      _
    %v38 = vld [vmem:[#allocation7] sm:$0xf]
    %v39 = vld [vmem:[#allocation4] sm:$0xf]
    %v40 = vadd.f32 %v39, %v38
    %41 = vst [vmem:[#allocation9] sm:$0xf] %v40
    // Predicated region
    $region18: #{tpu_custom_call.1} parent=1 // pred_check
      _
    $region19: #{tpu_custom_call.1} parent=1 // pred_check_branch
      %43 = sbr.rel (0) target = $region21
    $region20: #{tpu_custom_call.1} parent=1 // pred_region
      %s45 = ssub.s32 64, 64
      %46 = vsyncadd [#allocation6], %s45
      %s48 = sshll.u32 [#allocation9], 4
      %s49 = int_to_ptr.vmem [resolvable:$true] %s48
      %51 = dma.vmem_to_hbm [thread:$0]  %s49, 64, %s3, [#allocation6]
    $region21: #{tpu_custom_call.1} parent=1 // pred_fallthru
      _
    // Predicated region
    $region22: #{tpu_custom_call.1} parent=1 // pred_check
      _
    $region23: #{tpu_custom_call.1} parent=1 // pred_check_branch
      %53 = sbr.rel (0) target = $region25
    $region24: #{tpu_custom_call.1} parent=1 // pred_region
      %54 = dma.done [#allocation6], 64
    $region25: #{tpu_custom_call.1} parent=1 // pred_fallthru
      _
    %55 = vsyncpa [#allocation5], 1
    %56 = vsyncpa [#allocation8], 1
    %57 = vsyncpa [#allocation6], 1

</llo_original>
